<compile_context>
chip_gen: v5e
topology: v5e:2x2
jax: 0.10.0
libtpu: 0.0.40
codegen_flags: <defaults>
</compile_context>

<pallas_src>
import math

import jax
import jax.numpy as jnp
from jax.experimental import pallas as pl
from jax.experimental.pallas import tpu as pltpu

LANE = 128
NEG_FILL = -1e30  # bias padding for fake output classes -> exp() underflows to 0


def _round_up(x, m):
    return ((x + m - 1) // m) * m


def _pad2d(a, rows, cols, fill=0.0):
    out = jnp.full((rows, cols), fill, a.dtype)
    return out.at[: a.shape[0], : a.shape[1]].set(a)


def _pick_k_tile(kp, max_tk):
    t = max(LANE, min(kp, (max_tk // LANE) * LANE))
    while kp % t != 0:
        t -= LANE
    return t


def make_mlp_kernel(num_hidden):
    """Fused head: tiled Linear -> ReLU -> [Linear -> ReLU]* -> Linear -> log_softmax."""

    def kernel(*refs):
        x_ref = refs[0]
        wb = refs[1:-2]      # alternating (W, b): hidden layers then output layer
        out_ref = refs[-2]
        acc_ref = refs[-1]   # f32 accumulator for the first (K-tiled) layer

        k = pl.program_id(0)

        @pl.when(k == 0)
        def _():
            acc_ref[...] = jnp.zeros_like(acc_ref)

        # First layer partial product for this K tile: bf16 MXU inputs, f32 acc.
        acc_ref[...] += jnp.dot(
            x_ref[...], wb[0][...], preferred_element_type=jnp.float32
        )

        @pl.when(k == pl.num_programs(0) - 1)
        def _():
            # Bias + ReLU (Dropout = eval identity) in f32.
            h = jnp.maximum(acc_ref[...] + wb[1][...], 0.0)

            # Remaining hidden layers (small, lane-padded, VMEM-resident).
            for i in range(1, num_hidden):
                w = wb[2 * i][...]
                b = wb[2 * i + 1][...]
                h = jnp.dot(h.astype(jnp.bfloat16), w,
                            preferred_element_type=jnp.float32) + b
                h = jnp.maximum(h, 0.0)

            # Output layer.
            wo = wb[2 * num_hidden][...]
            bo = wb[2 * num_hidden + 1][...]
            logits = jnp.dot(h.astype(jnp.bfloat16), wo,
                             preferred_element_type=jnp.float32) + bo

            # Stable log_softmax over the (padded) class axis; padded classes
            # have logit == -1e30 so exp() contributes exactly 0.
            m = jnp.max(logits, axis=1, keepdims=True)
            shifted = logits - m
            lse = jnp.log(jnp.sum(jnp.exp(shifted), axis=1, keepdims=True))
            out_ref[...] = shifted - lse

    return kernel


def classifier_forward(x_nchw, weights, biases, *, max_k_tile=512):
    """x_nchw: (N, C, H, W) f32; weights[i]: (in_i, out_i); biases[i]: (out_i,)."""
    batch = x_nchw.shape[0]
    feats = x_nchw.reshape(batch, -1)          # == x.view(x.size(0), -1)
    n_output = weights[-1].shape[1]
    num_hidden = len(weights) - 1

    # Lane-dense padding of every layer width.
    dims = [w.shape[0] for w in weights] + [n_output]
    pdims = [_round_up(d, LANE) for d in dims]
    kp = pdims[0]

    # Pad + bf16-cast the MXU operands.
    xp = _pad2d(feats, batch, kp).astype(jnp.bfloat16)
    args = [xp]
    for li, (w, b) in enumerate(zip(weights, biases)):
        rp, cp = pdims[li], pdims[li + 1]
        bias_fill = NEG_FILL if li == num_hidden else 0.0
        args.append(_pad2d(w, rp, cp).astype(jnp.bfloat16))
        args.append(_pad2d(b.reshape(1, -1), 1, cp, fill=bias_fill).astype(jnp.float32))

    # Grid over the first layer's reduction dimension.
    tk = _pick_k_tile(kp, max_k_tile)
    n_k = kp // tk

    in_specs = [
        pl.BlockSpec((batch, tk), lambda k: (0, k)),          # x: K-tiled
        pl.BlockSpec((tk, pdims[1]), lambda k: (k, 0)),       # W0: K-tiled
        pl.BlockSpec((1, pdims[1]), lambda k: (0, 0)),        # b0: resident
    ]
    for li in range(1, num_hidden + 1):
        rp, cp = pdims[li], pdims[li + 1]
        in_specs.append(pl.BlockSpec((rp, cp), lambda k: (0, 0)))  # W_li: resident
        in_specs.append(pl.BlockSpec((1, cp), lambda k: (0, 0)))   # b_li: resident

    n_out_p = pdims[-1]
    out_spec = pl.BlockSpec((batch, n_out_p), lambda k: (0, 0))

    flops = 2 * batch * sum(pdims[i] * pdims[i + 1] for i in range(len(pdims) - 1))
    bytes_accessed = int(
        sum(int(a.size) * int(a.dtype.itemsize) for a in args) + batch * n_out_p * 4
    )

    out_padded = pl.pallas_call(
        make_mlp_kernel(num_hidden),
        out_shape=jax.ShapeDtypeStruct((batch, n_out_p), jnp.float32),
        grid_spec=pltpu.PrefetchScalarGridSpec(
            num_scalar_prefetch=0,
            grid=(n_k,),
            in_specs=in_specs,
            out_specs=out_spec,
            scratch_shapes=[pltpu.VMEM((batch, pdims[1]), jnp.float32)],
        ),
        compiler_params=pltpu.CompilerParams(
            dimension_semantics=("arbitrary",),
        ),
        cost_estimate=pl.CostEstimate(
            flops=int(flops),
            transcendentals=int(batch * (n_out_p + 1)),
            bytes_accessed=bytes_accessed,
        ),
    )(*args)

    return out_padded[:, :n_output]


def init_linear_params(key, fan_in, fan_out):
    """Deterministic init mimicking nn.Linear's default U(-1/sqrt(fan_in), ...)."""
    kw, kb = jax.random.split(key)
    bound = 1.0 / math.sqrt(fan_in)
    w = jax.random.uniform(kw, (fan_in, fan_out), jnp.float32, -bound, bound)
    b = jax.random.uniform(kb, (fan_out,), jnp.float32, -bound, bound)
    return w, b


def reference_forward(x_nchw, weights, biases):
    """Reference matching the kernel's numerics (bf16 matmul inputs, f32 acc)."""
    h = x_nchw.reshape(x_nchw.shape[0], -1)
    for w, b in zip(weights[:-1], biases[:-1]):
        h = jnp.dot(h.astype(jnp.bfloat16), w.astype(jnp.bfloat16),
                    preferred_element_type=jnp.float32) + b
        h = jnp.maximum(h, 0.0)
    logits = jnp.dot(h.astype(jnp.bfloat16), weights[-1].astype(jnp.bfloat16),
                     preferred_element_type=jnp.float32) + biases[-1]
    return jax.nn.log_softmax(logits, axis=1)


if __name__ == "__main__":
    key = jax.random.PRNGKey(0)

    # Small, self-consistent shapes: feature map (N=2, C=4, H=16, W=16) -> 1024 feats.
    batch, channels, spatial = 2, 4, 16
    n_features = channels * spatial * spatial
    n_hidden = [32, 32]
    n_output = 10

    k_x, *k_layers = jax.random.split(key, 2 + len(n_hidden))
    x = jax.random.normal(k_x, (batch, channels, spatial, spatial), jnp.float32)

    layer_dims = [n_features] + n_hidden + [n_output]
    weights, biases = [], []
    for i, (fi, fo) in enumerate(zip(layer_dims[:-1], layer_dims[1:])):
        w, b = init_linear_params(k_layers[i], fi, fo)
        weights.append(w)
        biases.append(b)

    out = classifier_forward(x, weights, biases)
    out = jax.block_until_ready(out)

    ref = reference_forward(x, weights, biases)
    assert out.shape == (batch, n_output)
    assert bool(jnp.all(jnp.isfinite(out))), "non-finite output"
    assert jnp.allclose(out, ref, atol=1e-2, rtol=1e-2), "mismatch vs JAX reference"

    print("KERNEL_OK")
</pallas_src>

<mosaic_0001>
module attributes {stable_mosaic.version = 11 : i64} {
  func.func @kernel(%arg0: i32, %arg1: memref<2x512xbf16, #tpu.memory_space<vmem>>, %arg2: memref<512x128xbf16, #tpu.memory_space<vmem>>, %arg3: memref<1x128xf32, #tpu.memory_space<vmem>>, %arg4: memref<128x128xbf16, #tpu.memory_space<vmem>>, %arg5: memref<1x128xf32, #tpu.memory_space<vmem>>, %arg6: memref<128x128xbf16, #tpu.memory_space<vmem>>, %arg7: memref<1x128xf32, #tpu.memory_space<vmem>>, %arg8: memref<2x128xf32, #tpu.memory_space<vmem>>, %arg9: memref<2x128xf32, #tpu.memory_space<vmem>>) attributes {dimension_semantics = [#tpu.dimension_semantics<arbitrary>], iteration_bounds = array<i64: 2>, scalar_prefetch = 0 : i64, scratch_operands = 1 : i64, tpu.core_type = #tpu.core_type<tc>, window_params = [{transform_indices = @transform_0, window_bounds = array<i64: 2, 512>}, {transform_indices = @transform_1, window_bounds = array<i64: 512, 128>}, {pipeline_mode = #tpu.pipeline_mode<synchronous>, transform_indices = @transform_2, window_bounds = array<i64: 1, 128>}, {pipeline_mode = #tpu.pipeline_mode<synchronous>, transform_indices = @transform_3, window_bounds = array<i64: 128, 128>}, {pipeline_mode = #tpu.pipeline_mode<synchronous>, transform_indices = @transform_4, window_bounds = array<i64: 1, 128>}, {pipeline_mode = #tpu.pipeline_mode<synchronous>, transform_indices = @transform_5, window_bounds = array<i64: 128, 128>}, {pipeline_mode = #tpu.pipeline_mode<synchronous>, transform_indices = @transform_6, window_bounds = array<i64: 1, 128>}, {pipeline_mode = #tpu.pipeline_mode<synchronous>, transform_indices = @transform_7, window_bounds = array<i64: 2, 128>}]} {
    %c0_i32 = arith.constant 0 : i32
    %0 = arith.cmpi eq, %arg0, %c0_i32 : i32
    %1 = arith.extui %0 : i1 to i32
    %c0_i32_0 = arith.constant 0 : i32
    %2 = arith.cmpi ne, %1, %c0_i32_0 : i32
    scf.if %2 {
      %cst_9 = arith.constant 0.000000e+00 : f32
      %12 = vector.broadcast %cst_9 : f32 to vector<2x128xf32>
      %c0_10 = arith.constant 0 : index
      %c0_11 = arith.constant 0 : index
      %13 = vector.load %arg9[%c0_10, %c0_11] : memref<2x128xf32, #tpu.memory_space<vmem>>, vector<2x128xf32>
      tpu.vector_store %arg9[%c0_10, %c0_11], %12 {strides = array<i32>} : memref<2x128xf32, #tpu.memory_space<vmem>>, vector<2x128xf32>,
    } else {
    }
    %c0 = arith.constant 0 : index
    %c0_1 = arith.constant 0 : index
    %3 = vector.load %arg9[%c0, %c0_1] : memref<2x128xf32, #tpu.memory_space<vmem>>, vector<2x128xf32>
    %c0_2 = arith.constant 0 : index
    %c0_3 = arith.constant 0 : index
    %4 = vector.load %arg1[%c0_2, %c0_3] : memref<2x512xbf16, #tpu.memory_space<vmem>>, vector<2x512xbf16>
    %c0_4 = arith.constant 0 : index
    %c0_5 = arith.constant 0 : index
    %5 = vector.load %arg2[%c0_4, %c0_5] : memref<512x128xbf16, #tpu.memory_space<vmem>>, vector<512x128xbf16>
    %cst = arith.constant dense<0.000000e+00> : vector<2x128xf32>
    %6 = tpu.matmul %4, %5, %cst {dimension_numbers = #tpu.dot_dimension_numbers<[1], [0], [0], [1], [0, 0, 1, 1], [], []>} : vector<2x512xbf16>, vector<512x128xbf16>, vector<2x128xf32> -> vector<2x128xf32>
    %7 = arith.addf %3, %6 : vector<2x128xf32>
    %c0_6 = arith.constant 0 : index
    %c0_7 = arith.constant 0 : index
    %8 = vector.load %arg9[%c0_6, %c0_7] : memref<2x128xf32, #tpu.memory_space<vmem>>, vector<2x128xf32>
    tpu.vector_store %arg9[%c0_6, %c0_7], %7 {strides = array<i32>} : memref<2x128xf32, #tpu.memory_space<vmem>>, vector<2x128xf32>,
    %c1_i32 = arith.constant 1 : i32
    %9 = arith.cmpi eq, %arg0, %c1_i32 : i32
    %10 = arith.extui %9 : i1 to i32
    %c0_i32_8 = arith.constant 0 : i32
    %11 = arith.cmpi ne, %10, %c0_i32_8 : i32
    scf.if %11 {
      %c0_9 = arith.constant 0 : index
      %c0_10 = arith.constant 0 : index
      %12 = vector.load %arg9[%c0_9, %c0_10] : memref<2x128xf32, #tpu.memory_space<vmem>>, vector<2x128xf32>
      %c0_11 = arith.constant 0 : index
      %c0_12 = arith.constant 0 : index
      %13 = vector.load %arg3[%c0_11, %c0_12] : memref<1x128xf32, #tpu.memory_space<vmem>>, vector<1x128xf32>
      %14 = vector.broadcast %13 : vector<1x128xf32> to vector<2x128xf32>
      %15 = arith.addf %12, %14 : vector<2x128xf32>
      %cst_13 = arith.constant 0.000000e+00 : f32
      %16 = vector.broadcast %cst_13 : f32 to vector<2x128xf32>
      %17 = arith.maximumf %15, %16 : vector<2x128xf32>
      %c0_14 = arith.constant 0 : index
      %c0_15 = arith.constant 0 : index
      %18 = vector.load %arg4[%c0_14, %c0_15] : memref<128x128xbf16, #tpu.memory_space<vmem>>, vector<128x128xbf16>
      %c0_16 = arith.constant 0 : index
      %c0_17 = arith.constant 0 : index
      %19 = vector.load %arg5[%c0_16, %c0_17] : memref<1x128xf32, #tpu.memory_space<vmem>>, vector<1x128xf32>
      %20 = arith.truncf %17 : vector<2x128xf32> to vector<2x128xbf16>
      %cst_18 = arith.constant dense<0.000000e+00> : vector<2x128xf32>
      %21 = tpu.matmul %20, %18, %cst_18 {dimension_numbers = #tpu.dot_dimension_numbers<[1], [0], [0], [1], [0, 0, 1, 1], [], []>} : vector<2x128xbf16>, vector<128x128xbf16>, vector<2x128xf32> -> vector<2x128xf32>
      %22 = vector.broadcast %19 : vector<1x128xf32> to vector<2x128xf32>
      %23 = arith.addf %21, %22 : vector<2x128xf32>
      %cst_19 = arith.constant 0.000000e+00 : f32
      %24 = vector.broadcast %cst_19 : f32 to vector<2x128xf32>
      %25 = arith.maximumf %23, %24 : vector<2x128xf32>
      %c0_20 = arith.constant 0 : index
      %c0_21 = arith.constant 0 : index
      %26 = vector.load %arg6[%c0_20, %c0_21] : memref<128x128xbf16, #tpu.memory_space<vmem>>, vector<128x128xbf16>
      %c0_22 = arith.constant 0 : index
      %c0_23 = arith.constant 0 : index
      %27 = vector.load %arg7[%c0_22, %c0_23] : memref<1x128xf32, #tpu.memory_space<vmem>>, vector<1x128xf32>
      %28 = arith.truncf %25 : vector<2x128xf32> to vector<2x128xbf16>
      %cst_24 = arith.constant dense<0.000000e+00> : vector<2x128xf32>
      %29 = tpu.matmul %28, %26, %cst_24 {dimension_numbers = #tpu.dot_dimension_numbers<[1], [0], [0], [1], [0, 0, 1, 1], [], []>} : vector<2x128xbf16>, vector<128x128xbf16>, vector<2x128xf32> -> vector<2x128xf32>
      %30 = vector.broadcast %27 : vector<1x128xf32> to vector<2x128xf32>
      %31 = arith.addf %29, %30 : vector<2x128xf32>
      %cst_25 = arith.constant dense<0xFF800000> : vector<2xf32>
      %32 = vector.multi_reduction <maximumf>, %31, %cst_25 [1] : vector<2x128xf32> to vector<2xf32>
      %33 = vector.shape_cast %32 : vector<2xf32> to vector<2x1xf32>
      %34 = vector.broadcast %33 : vector<2x1xf32> to vector<2x128xf32>
      %35 = arith.subf %31, %34 : vector<2x128xf32>
      %36 = math.exp %35 : vector<2x128xf32>
      %cst_26 = arith.constant dense<0.000000e+00> : vector<2xf32>
      %37 = vector.multi_reduction <add>, %36, %cst_26 [1] : vector<2x128xf32> to vector<2xf32>
      %38 = vector.shape_cast %37 : vector<2xf32> to vector<2x1xf32>
      %39 = math.log %38 : vector<2x1xf32>
      %40 = vector.broadcast %39 : vector<2x1xf32> to vector<2x128xf32>
      %41 = arith.subf %35, %40 : vector<2x128xf32>
      %c0_27 = arith.constant 0 : index
      %c0_28 = arith.constant 0 : index
      %42 = vector.load %arg8[%c0_27, %c0_28] : memref<2x128xf32, #tpu.memory_space<vmem>>, vector<2x128xf32>
      tpu.vector_store %arg8[%c0_27, %c0_28], %41 {strides = array<i32>} : memref<2x128xf32, #tpu.memory_space<vmem>>, vector<2x128xf32>,
    } else {
    }
    return
  }
  func.func @transform_0(%arg0: i32) -> (i32, i32) {
    %c0_i32 = arith.constant 0 : i32
    %c0_i32_0 = arith.constant 0 : i32
    return %c0_i32, %arg0 : i32, i32
  }
  func.func @transform_1(%arg0: i32) -> (i32, i32) {
    %c0_i32 = arith.constant 0 : i32
    %c0_i32_0 = arith.constant 0 : i32
    return %arg0, %c0_i32 : i32, i32
  }
  func.func @transform_2(%arg0: i32) -> (i32, i32) {
    %c0_i32 = arith.constant 0 : i32
    %c0_i32_0 = arith.constant 0 : i32
    %c0_i32_1 = arith.constant 0 : i32
    return %c0_i32, %c0_i32_0 : i32, i32
  }
  func.func @transform_3(%arg0: i32) -> (i32, i32) {
    %c0_i32 = arith.constant 0 : i32
    %c0_i32_0 = arith.constant 0 : i32
    %c0_i32_1 = arith.constant 0 : i32
    return %c0_i32, %c0_i32_0 : i32, i32
  }
  func.func @transform_4(%arg0: i32) -> (i32, i32) {
    %c0_i32 = arith.constant 0 : i32
    %c0_i32_0 = arith.constant 0 : i32
    %c0_i32_1 = arith.constant 0 : i32
    return %c0_i32, %c0_i32_0 : i32, i32
  }
  func.func @transform_5(%arg0: i32) -> (i32, i32) {
    %c0_i32 = arith.constant 0 : i32
    %c0_i32_0 = arith.constant 0 : i32
    %c0_i32_1 = arith.constant 0 : i32
    return %c0_i32, %c0_i32_0 : i32, i32
  }
  func.func @transform_6(%arg0: i32) -> (i32, i32) {
    %c0_i32 = arith.constant 0 : i32
    %c0_i32_0 = arith.constant 0 : i32
    %c0_i32_1 = arith.constant 0 : i32
    return %c0_i32, %c0_i32_0 : i32, i32
  }
  func.func @transform_7(%arg0: i32) -> (i32, i32) {
    %c0_i32 = arith.constant 0 : i32
    %c0_i32_0 = arith.constant 0 : i32
    %c0_i32_1 = arith.constant 0 : i32
    return %c0_i32, %c0_i32_0 : i32, i32
  }
}

</mosaic_0001>

<llo_original>
// kernel: tpu_custom_call.1
$region0: #{tpu_custom_call.1}
  #allocation0 [shape = 'u32[]', space=smem, size = 0x4, offset = 0x4, fixed_abs, tag = 'smem constant byte address 0x4 - core index']
  #allocation1 [shape = 'u32[72,128]{1,0:T(1,128)}', space=vmem, size = 0x9000, scoped, tag = 'internal scratch']
  #allocation2 [shape = 'f32[2,128]{1,0:T(2,128)}', space=vmem, size = 0x400, scoped, tag = 'scratch operand']
  %s0 = inlined_call_operand.hbm [shape: bf16[2,1024], index: 0, kind: input, shape index: {}]
  %s1 = inlined_call_operand.hbm [shape: bf16[1024,128], index: 1, kind: input, shape index: {}]
  %s2 = inlined_call_operand.vmem [shape: f32[1,128], index: 2, kind: input, shape index: {}]
  %s3 = inlined_call_operand.hbm [shape: bf16[128,128], index: 3, kind: input, shape index: {}]
  %s4 = inlined_call_operand.vmem [shape: f32[1,128], index: 4, kind: input, shape index: {}]
  %s5 = inlined_call_operand.hbm [shape: bf16[128,128], index: 5, kind: input, shape index: {}]
  %s6 = inlined_call_operand.vmem [shape: f32[1,128], index: 6, kind: input, shape index: {}]
  %s7 = inlined_call_operand.hbm [shape: f32[2,128], index: 7, kind: output, shape index: {}]
  %s8 = sld [smem:[#allocation0]]
  $region85: #{tpu_custom_call.1} parent=0
    _
  %s10 = ssub.s32 1, %s8
  %s11 = scalar_select 0, %s10, %s8
  $region1: #{tpu_custom_call.1} parent=0
    #allocation3 [shape = 'u8[4096]{0}', space=vmem, size = 0x1000, scoped, tag = 'input window, operand 0']
    #allocation4 [shape = 's32[2]{0}', space=sflag, size = 0x8, scoped, tag = 'scoped memory for tpu_custom_call.1']
    #allocation5 [shape = 's32[2]{0}', space=sflag, size = 0x8, scoped, tag = 'scoped memory for tpu_custom_call.1']
    #allocation6 [shape = 'u8[262144]{0}', space=vmem, size = 0x40000, scoped, tag = 'input window, operand 1']
    #allocation7 [shape = 's32[2]{0}', space=sflag, size = 0x8, scoped, tag = 'scoped memory for tpu_custom_call.1']
    #allocation8 [shape = 'u8[32768]{0}', space=vmem, size = 0x8000, scoped, tag = 'input window, operand 3, single buffered']
    #allocation9 [shape = 'u8[32768]{0}', space=vmem, size = 0x8000, scoped, tag = 'input window, operand 5, single buffered']
    #allocation10 [shape = 's32[1]{0}', space=sflag, size = 0x4, scoped, tag = 'scoped memory for tpu_custom_call.1']
    #allocation11 [shape = 'u8[1024]{0}', space=vmem, size = 0x400, scoped, tag = 'output window, operand 0, single buffered']
    %12 = vsyncpa [#allocation4], 0
    %s13 = scalar_lea.sflag [#allocation4], 1
    %14 = vsyncpa %s13, 0
    %15 = vsyncpa [#allocation7], 0
    %s16 = scalar_lea.sflag [#allocation7], 1
    %17 = vsyncpa %s16, 0
    %18 = vsyncpa [#allocation10], 0
    %19 = vsyncpa [#allocation5], 0
    loop: start=0, step=1, limit=4
    $region2: #{tpu_custom_call.1} parent=1 // loop_pre_header
      _
    $region3: #{tpu_custom_call.1} parent=1 // loop_header
      %s21 = sphi 0, %s25
      %p22 = scmp.ge.s32.totalorder %s21, 4
      %s31 = sphi 0, %s33
      %s34 = sphi 0, %s31
      %s35 = sphi 0, %s34
      %s51 = sphi 0, %s35
      %s57 = sphi 0, %s59
      %s60 = sphi 0, %s57
      %s61 = sphi 0, %s60
      %s77 = sphi 0, %s61
      %s81 = sphi 0, %s81
      %s83 = sphi 0, %s81
      %s84 = sphi 0, %s83
      %s98 = sphi 0, %s84
      %s102 = sphi 0, %s102
      %s104 = sphi 0, %s102
      %s105 = sphi 0, %s104
      %s119 = sphi 0, %s105
      %s123 = sphi 0, %s123
      %s125 = sphi 0, %s123
      %s126 = sphi 0, %s125
      %s140 = sphi 0, %s126
      %s144 = sphi 0, %s144
      %s146 = sphi 0, %s144
      %s147 = sphi 0, %s146
      %s161 = sphi 0, %s147
      %s165 = sphi 0, %s165
      %s167 = sphi 0, %s165
      %s168 = sphi 0, %s167
      %s182 = sphi 0, %s168
      %s186 = sphi 0, %s186
      %s188 = sphi 0, %s186
      %s189 = sphi 0, %s188
      %s203 = sphi 0, %s189
    $region4: #{tpu_custom_call.1} parent=1 // loop_header_branch
      %24 = sbr.rel (%p22) target = $region8
    $region5: #{tpu_custom_call.1} parent=1 // loop_body
      %s26 = ssub.s32 %s21, 1
      %s27 = ssub.s32 %s21, 2
      %s28 = sadd.s32 %s21, 1
      %s29 = ssub.s32 %s21, %s28
      %p30 = scmp.eq.s32.totalorder %s29, 0
      %s32 = sadd.s32 %s31, 1
      %s33 = scalar_select %p30, %s31, %s32
      %p36 = pneg %p30
      %p37 = scmp.eq.s32.totalorder %s21, 1
      %p38 = por %p36, %p37
      %p39 = scmp.ne.s32.totalorder %s31, %s34
      %p40 = scmp.eq.s32.totalorder %s21, 0
      %p41 = por %p39, %p40
      %p42 = scmp.ne.s32.totalorder %s31, %s34
      %p43 = scmp.eq.s32.totalorder %s26, 1
      %p44 = por %p42, %p43
      %p45 = scmp.ne.s32.totalorder %s34, %s35
      %p46 = scmp.eq.s32.totalorder %s26, 0
      %p47 = por %p45, %p46
      %p48 = scmp.ne.s32.totalorder %s34, %s35
      %p49 = scmp.eq.s32.totalorder %s27, 1
      %p50 = por %p48, %p49
      %p52 = scmp.ne.s32.totalorder %s35, %s51
      %p53 = scmp.eq.s32.totalorder %s27, 0
      %p54 = por %p52, %p53
      %s55 = ssub.s32 %s21, %s28
      %p56 = scmp.eq.s32.totalorder %s55, 0
      %s58 = sadd.s32 %s57, 1
      %s59 = scalar_select %p56, %s57, %s58
      %p62 = pneg %p56
      %p63 = scmp.eq.s32.totalorder %s21, 1
      %p64 = por %p62, %p63
      %p65 = scmp.ne.s32.totalorder %s57, %s60
      %p66 = scmp.eq.s32.totalorder %s21, 0
      %p67 = por %p65, %p66
      %p68 = scmp.ne.s32.totalorder %s57, %s60
      %p69 = scmp.eq.s32.totalorder %s26, 1
      %p70 = por %p68, %p69
      %p71 = scmp.ne.s32.totalorder %s60, %s61
      %p72 = scmp.eq.s32.totalorder %s26, 0
      %p73 = por %p71, %p72
      %p74 = scmp.ne.s32.totalorder %s60, %s61
      %p75 = scmp.eq.s32.totalorder %s27, 1
      %p76 = por %p74, %p75
      %p78 = scmp.ne.s32.totalorder %s61, %s77
      %p79 = scmp.eq.s32.totalorder %s27, 0
      %p80 = por %p78, %p79
      %s82 = sadd.s32 %s81, 1
      %p85 = scmp.eq.s32.totalorder %s21, 1
      %p86 = scmp.ne.s32.totalorder %s81, %s83
      %p87 = scmp.eq.s32.totalorder %s21, 0
      %p88 = por %p86, %p87
      %p89 = scmp.ne.s32.totalorder %s81, %s83
      %p90 = scmp.eq.s32.totalorder %s26, 1
      %p91 = por %p89, %p90
      %p92 = scmp.ne.s32.totalorder %s83, %s84
      %p93 = scmp.eq.s32.totalorder %s26, 0
      %p94 = por %p92, %p93
      %p95 = scmp.ne.s32.totalorder %s83, %s84
      %p96 = scmp.eq.s32.totalorder %s27, 1
      %p97 = por %p95, %p96
      %p99 = scmp.ne.s32.totalorder %s84, %s98
      %p100 = scmp.eq.s32.totalorder %s27, 0
      %p101 = por %p99, %p100
      %s103 = sadd.s32 %s102, 1
      %p106 = scmp.eq.s32.totalorder %s21, 1
      %p107 = scmp.ne.s32.totalorder %s102, %s104
      %p108 = scmp.eq.s32.totalorder %s21, 0
      %p109 = por %p107, %p108
      %p110 = scmp.ne.s32.totalorder %s102, %s104
      %p111 = scmp.eq.s32.totalorder %s26, 1
      %p112 = por %p110, %p111
      %p113 = scmp.ne.s32.totalorder %s104, %s105
      %p114 = scmp.eq.s32.totalorder %s26, 0
      %p115 = por %p113, %p114
      %p116 = scmp.ne.s32.totalorder %s104, %s105
      %p117 = scmp.eq.s32.totalorder %s27, 1
      %p118 = por %p116, %p117
      %p120 = scmp.ne.s32.totalorder %s105, %s119
      %p121 = scmp.eq.s32.totalorder %s27, 0
      %p122 = por %p120, %p121
      %s124 = sadd.s32 %s123, 1
      %p127 = scmp.eq.s32.totalorder %s21, 1
      %p128 = scmp.ne.s32.totalorder %s123, %s125
      %p129 = scmp.eq.s32.totalorder %s21, 0
      %p130 = por %p128, %p129
      %p131 = scmp.ne.s32.totalorder %s123, %s125
      %p132 = scmp.eq.s32.totalorder %s26, 1
      %p133 = por %p131, %p132
      %p134 = scmp.ne.s32.totalorder %s125, %s126
      %p135 = scmp.eq.s32.totalorder %s26, 0
      %p136 = por %p134, %p135
      %p137 = scmp.ne.s32.totalorder %s125, %s126
      %p138 = scmp.eq.s32.totalorder %s27, 1
      %p139 = por %p137, %p138
      %p141 = scmp.ne.s32.totalorder %s126, %s140
      %p142 = scmp.eq.s32.totalorder %s27, 0
      %p143 = por %p141, %p142
      %s145 = sadd.s32 %s144, 1
      %p148 = scmp.eq.s32.totalorder %s21, 1
      %p149 = scmp.ne.s32.totalorder %s144, %s146
      %p150 = scmp.eq.s32.totalorder %s21, 0
      %p151 = por %p149, %p150
      %p152 = scmp.ne.s32.totalorder %s144, %s146
      %p153 = scmp.eq.s32.totalorder %s26, 1
      %p154 = por %p152, %p153
      %p155 = scmp.ne.s32.totalorder %s146, %s147
      %p156 = scmp.eq.s32.totalorder %s26, 0
      %p157 = por %p155, %p156
      %p158 = scmp.ne.s32.totalorder %s146, %s147
      %p159 = scmp.eq.s32.totalorder %s27, 1
      %p160 = por %p158, %p159
      %p162 = scmp.ne.s32.totalorder %s147, %s161
      %p163 = scmp.eq.s32.totalorder %s27, 0
      %p164 = por %p162, %p163
      %s166 = sadd.s32 %s165, 1
      %p169 = scmp.eq.s32.totalorder %s21, 1
      %p170 = scmp.ne.s32.totalorder %s165, %s167
      %p171 = scmp.eq.s32.totalorder %s21, 0
      %p172 = por %p170, %p171
      %p173 = scmp.ne.s32.totalorder %s165, %s167
      %p174 = scmp.eq.s32.totalorder %s26, 1
      %p175 = por %p173, %p174
      %p176 = scmp.ne.s32.totalorder %s167, %s168
      %p177 = scmp.eq.s32.totalorder %s26, 0
      %p178 = por %p176, %p177
      %p179 = scmp.ne.s32.totalorder %s167, %s168
      %p180 = scmp.eq.s32.totalorder %s27, 1
      %p181 = por %p179, %p180
      %p183 = scmp.ne.s32.totalorder %s168, %s182
      %p184 = scmp.eq.s32.totalorder %s27, 0
      %p185 = por %p183, %p184
      %s187 = sadd.s32 %s186, 1
      %p190 = scmp.eq.s32.totalorder %s21, 1
      %p191 = scmp.ne.s32.totalorder %s186, %s188
      %p192 = scmp.eq.s32.totalorder %s21, 0
      %p193 = por %p191, %p192
      %p194 = scmp.ne.s32.totalorder %s186, %s188
      %p195 = scmp.eq.s32.totalorder %s26, 1
      %p196 = por %p194, %p195
      %p197 = scmp.ne.s32.totalorder %s188, %s189
      %p198 = scmp.eq.s32.totalorder %s26, 0
      %p199 = por %p197, %p198
      %p200 = scmp.ne.s32.totalorder %s188, %s189
      %p201 = scmp.eq.s32.totalorder %s27, 1
      %p202 = por %p200, %p201
      %p204 = scmp.ne.s32.totalorder %s189, %s203
      %p205 = scmp.eq.s32.totalorder %s27, 0
      %p206 = por %p204, %p205
      %p207 = scmp.le.s32.totalorder 1, %s21
      %p208 = scmp.lt.s32.totalorder %s21, 3
      %p209 = pnand %p207, %p208
      %p210 = pneg %p209
      // Predicated region
      $region9: #{tpu_custom_call.1} parent=5 // pred_check
        _
      $region10: #{tpu_custom_call.1} parent=5 // pred_check_branch
        %212 = sbr.rel (%p209) target = $region12
      $region11: #{tpu_custom_call.1} parent=5 // pred_region
        %s213 = ssub.s32 %s21, 1
        // Predicated region
        $region13: #{tpu_custom_call.1} parent=11 // pred_check
          %p214 = pneg %p94
        $region14: #{tpu_custom_call.1} parent=11 // pred_check_branch
          %216 = sbr.rel (%p214) target = $region16
        $region15: #{tpu_custom_call.1} parent=11 // pred_region
          _
        $region16: #{tpu_custom_call.1} parent=11 // pred_fallthru
          _
        // Predicated region
        $region17: #{tpu_custom_call.1} parent=11 // pred_check
          %p217 = pneg %p115
        $region18: #{tpu_custom_call.1} parent=11 // pred_check_branch
          %219 = sbr.rel (%p217) target = $region20
        $region19: #{tpu_custom_call.1} parent=11 // pred_region
          %221 = vsyncadd [#allocation7], 0
          %s222 = sshll.u32 %s3, 4
          %s223 = int_to_ptr.hbm [resolvable:$true] %s222
          %s224 = sshll.u32 [#allocation8], 4
          %s225 = int_to_ptr.vmem [resolvable:$true] %s224
          %230 = dma.hbm_to_vmem [thread:$0]  %s223, 1024, %s225, [#allocation7], 64, 64, 4
        $region20: #{tpu_custom_call.1} parent=11 // pred_fallthru
          _
        // Predicated region
        $region21: #{tpu_custom_call.1} parent=11 // pred_check
          %p231 = pneg %p136
        $region22: #{tpu_custom_call.1} parent=11 // pred_check_branch
          %233 = sbr.rel (%p231) target = $region24
        $region23: #{tpu_custom_call.1} parent=11 // pred_region
          _
        $region24: #{tpu_custom_call.1} parent=11 // pred_fallthru
          _
        // Predicated region
        $region25: #{tpu_custom_call.1} parent=11 // pred_check
          %p234 = pneg %p157
        $region26: #{tpu_custom_call.1} parent=11 // pred_check_branch
          %236 = sbr.rel (%p234) target = $region28
        $region27: #{tpu_custom_call.1} parent=11 // pred_region
          %238 = vsyncadd [#allocation10], 0
          %s239 = sshll.u32 %s5, 4
          %s240 = int_to_ptr.hbm [resolvable:$true] %s239
          %s241 = sshll.u32 [#allocation9], 4
          %s242 = int_to_ptr.vmem [resolvable:$true] %s241
          %247 = dma.hbm_to_vmem [thread:$0]  %s240, 1024, %s242, [#allocation10], 64, 64, 4
        $region28: #{tpu_custom_call.1} parent=11 // pred_fallthru
          _
        // Predicated region
        $region29: #{tpu_custom_call.1} parent=11 // pred_check
          %p248 = pneg %p178
        $region30: #{tpu_custom_call.1} parent=11 // pred_check_branch
          %250 = sbr.rel (%p248) target = $region32
        $region31: #{tpu_custom_call.1} parent=11 // pred_region
          _
        $region32: #{tpu_custom_call.1} parent=11 // pred_fallthru
          _
      $region12: #{tpu_custom_call.1} parent=5 // pred_fallthru
        _
      %p251 = scmp.lt.s32.totalorder %s21, 2
      // Predicated region
      $region33: #{tpu_custom_call.1} parent=5 // pred_check
        %p252 = pneg %p251
      $region34: #{tpu_custom_call.1} parent=5 // pred_check_branch
        %254 = sbr.rel (%p252) target = $region36
      $region35: #{tpu_custom_call.1} parent=5 // pred_region
        // Predicated region
        $region37: #{tpu_custom_call.1} parent=35 // pred_check
          %p255 = pneg %p41
        $region38: #{tpu_custom_call.1} parent=35 // pred_check_branch
          %257 = sbr.rel (%p255) target = $region40
        $region39: #{tpu_custom_call.1} parent=35 // pred_region
          %s258 = sand.u32 %s31, 1
          %s259 = scalar_lea.sflag [#allocation4], %s258
          %s260 = sand.u32 %s31, 1
          %s261 = smul.addr %s260, 4
          %s262 = scalar_lea.vmem [#allocation3], %s261
          %s263 = smul.u32 4, %s21
          %265 = vsyncadd %s259, 0
          %s266 = scalar_lea.hbm %s0, %s263
          %s268 = sshll.u32 %s266, 4
          %s269 = int_to_ptr.hbm [resolvable:$true] %s268
          %s270 = sshll.u32 %s262, 4
          %s271 = int_to_ptr.vmem [resolvable:$true] %s270
          %273 = dma.hbm_to_vmem [thread:$0]  %s269, 64, %s271, %s259
        $region40: #{tpu_custom_call.1} parent=35 // pred_fallthru
          _
        // Predicated region
        $region41: #{tpu_custom_call.1} parent=35 // pred_check
          %p274 = pneg %p67
        $region42: #{tpu_custom_call.1} parent=35 // pred_check_branch
          %276 = sbr.rel (%p274) target = $region44
        $region43: #{tpu_custom_call.1} parent=35 // pred_region
          %s277 = sand.u32 %s21, 1
          %s278 = scalar_lea.sflag [#allocation7], %s277
          %s279 = sand.u32 %s57, 1
          %s280 = smul.addr %s279, 256
          %s281 = scalar_lea.vmem [#allocation6], %s280
          %s282 = smul.u32 64, %s21
          %284 = vsyncadd %s278, 0
          %s285 = smul.addr %s282, 4
          %s286 = scalar_lea.hbm %s1, %s285
          %s287 = sshll.u32 %s286, 4
          %s288 = int_to_ptr.hbm [resolvable:$true] %s287
          %s289 = sshll.u32 %s281, 4
          %s290 = int_to_ptr.vmem [resolvable:$true] %s289
          %295 = dma.hbm_to_vmem [thread:$0]  %s288, 4096, %s290, %s278, 64, 64, 4
        $region44: #{tpu_custom_call.1} parent=35 // pred_fallthru
          _
      $region36: #{tpu_custom_call.1} parent=5 // pred_fallthru
        _
      %p296 = scmp.le.s32.totalorder 1, %s21
      %p297 = scmp.lt.s32.totalorder %s21, 3
      %p298 = pnand %p296, %p297
      %p299 = pneg %p298
      // Predicated region
      $region45: #{tpu_custom_call.1} parent=5 // pred_check
        _
      $region46: #{tpu_custom_call.1} parent=5 // pred_check_branch
        %301 = sbr.rel (%p298) target = $region48
      $region47: #{tpu_custom_call.1} parent=5 // pred_region
        %s302 = ssub.s32 %s21, 1
        %s303 = sand.u32 %s34, 1
        %s304 = scalar_lea.sflag [#allocation4], %s303
        %s305 = sand.u32 %s34, 1
        %s306 = smul.addr %s305, 4
        %s307 = scalar_lea.vmem [#allocation3], %s306
        // Predicated region
        $region49: #{tpu_custom_call.1} parent=47 // pred_check
          %p308 = pneg %p47
        $region50: #{tpu_custom_call.1} parent=47 // pred_check_branch
          %310 = sbr.rel (%p308) target = $region52
        $region51: #{tpu_custom_call.1} parent=47 // pred_region
          %312 = dma.done %s304, 64
        $region52: #{tpu_custom_call.1} parent=47 // pred_fallthru
          _
        %s313 = sand.u32 %s26, 1
        %s314 = scalar_lea.sflag [#allocation7], %s313
        %s315 = sand.u32 %s60, 1
        %s316 = smul.addr %s315, 256
        %s317 = scalar_lea.vmem [#allocation6], %s316
        // Predicated region
        $region53: #{tpu_custom_call.1} parent=47 // pred_check
          %p318 = pneg %p73
        $region54: #{tpu_custom_call.1} parent=47 // pred_check_branch
          %320 = sbr.rel (%p318) target = $region56
        $region55: #{tpu_custom_call.1} parent=47 // pred_region
          %322 = dma.done %s314, 4096
        $region56: #{tpu_custom_call.1} parent=47 // pred_fallthru
          _
        // Predicated region
        $region57: #{tpu_custom_call.1} parent=47 // pred_check
          %p323 = pneg %p115
        $region58: #{tpu_custom_call.1} parent=47 // pred_check_branch
          %325 = sbr.rel (%p323) target = $region60
        $region59: #{tpu_custom_call.1} parent=47 // pred_region
          %327 = dma.done [#allocation7], 1024
        $region60: #{tpu_custom_call.1} parent=47 // pred_fallthru
          _
        // Predicated region
        $region61: #{tpu_custom_call.1} parent=47 // pred_check
          %p328 = pneg %p157
        $region62: #{tpu_custom_call.1} parent=47 // pred_check_branch
          %330 = sbr.rel (%p328) target = $region64
        $region63: #{tpu_custom_call.1} parent=47 // pred_region
          %332 = dma.done [#allocation10], 1024
        $region64: #{tpu_custom_call.1} parent=47 // pred_fallthru
          _
        %s333 = sand.u32 %s34, 1
        %s334 = scalar_lea.sflag [#allocation4], %s333
        %s335 = sand.u32 %s34, 1
        %s336 = smul.addr %s335, 4
        %s337 = scalar_lea.vmem [#allocation3], %s336
        %p338 = pneg %p47
        %p339 = pneg %p44
        %s340 = sand.u32 %s26, 1
        %s341 = scalar_lea.sflag [#allocation7], %s340
        %s342 = sand.u32 %s60, 1
        %s343 = smul.addr %s342, 256
        %s344 = scalar_lea.vmem [#allocation6], %s343
        %p345 = pneg %p73
        %p346 = pneg %p70
        %p347 = pneg %p94
        %p348 = pneg %p91
        %p349 = pneg %p115
        %p350 = pneg %p112
        %p351 = pneg %p136
        %p352 = pneg %p133
        %p353 = pneg %p157
        %p354 = pneg %p154
        %p355 = pneg %p178
        %p356 = pneg %p175
        %p357 = pneg %p199
        %p358 = pneg %p196
        %s359 = smul.u32 4, %s26
        %s360 = smul.u32 64, %s26
        %p361 = scmp.eq.s32.totalorder %s26, 0
        // Predicated region
        $region65: #{tpu_custom_call.1} parent=47 // pred_check
          %p362 = pneg %p361
        $region66: #{tpu_custom_call.1} parent=47 // pred_check_branch
          %364 = sbr.rel (%p362) target = $region68
        $region67: #{tpu_custom_call.1} parent=47 // pred_region
          %365 = vst [vmem:[#allocation2] sm:$0x3] 0.0
        $region68: #{tpu_custom_call.1} parent=47 // pred_fallthru
          _
        %v366 = vld [vmem:[#allocation2] sm:$0x3]
        %v367 = vld [vmem:[%s307] sm:$0xf]
        %v368 = vld [vmem:[%s317] sm:$0xf]
        %v369 = vld [vmem:[%s317 + $0x4] sm:$0xf]
        %v370 = vld [vmem:[%s317 + $0x8] sm:$0xf]
        %v371 = vld [vmem:[%s317 + $0xc] sm:$0xf]
        %v372 = vld [vmem:[%s317 + $0x10] sm:$0xf]
        %v373 = vld [vmem:[%s317 + $0x14] sm:$0xf]
        %v374 = vld [vmem:[%s317 + $0x18] sm:$0xf]
        %v375 = vld [vmem:[%s317 + $0x1c] sm:$0xf]
        %v376 = vld [vmem:[%s317 + $0x20] sm:$0xf]
        %v377 = vld [vmem:[%s317 + $0x24] sm:$0xf]
        %v378 = vld [vmem:[%s317 + $0x28] sm:$0xf]
        %v379 = vld [vmem:[%s317 + $0x2c] sm:$0xf]
        %v380 = vld [vmem:[%s317 + $0x30] sm:$0xf]
        %v381 = vld [vmem:[%s317 + $0x34] sm:$0xf]
        %v382 = vld [vmem:[%s317 + $0x38] sm:$0xf]
        %v383 = vld [vmem:[%s317 + $0x3c] sm:$0xf]
        %v384 = vld [vmem:[%s317 + $0x40] sm:$0xf]
        %v385 = vld [vmem:[%s317 + $0x44] sm:$0xf]
        %v386 = vld [vmem:[%s317 + $0x48] sm:$0xf]
        %v387 = vld [vmem:[%s317 + $0x4c] sm:$0xf]
        %v388 = vld [vmem:[%s317 + $0x50] sm:$0xf]
        %v389 = vld [vmem:[%s317 + $0x54] sm:$0xf]
        %v390 = vld [vmem:[%s317 + $0x58] sm:$0xf]
        %v391 = vld [vmem:[%s317 + $0x5c] sm:$0xf]
        %v392 = vld [vmem:[%s317 + $0x60] sm:$0xf]
        %v393 = vld [vmem:[%s317 + $0x64] sm:$0xf]
        %v394 = vld [vmem:[%s317 + $0x68] sm:$0xf]
        %v395 = vld [vmem:[%s317 + $0x6c] sm:$0xf]
        %v396 = vld [vmem:[%s317 + $0x70] sm:$0xf]
        %v397 = vld [vmem:[%s317 + $0x74] sm:$0xf]
        %v398 = vld [vmem:[%s317 + $0x78] sm:$0xf]
        %v399 = vld [vmem:[%s317 + $0x7c] sm:$0xf]
        %v400 = vld [vmem:[%s317 + $0x80] sm:$0xf]
        %v401 = vld [vmem:[%s317 + $0x84] sm:$0xf]
        %v402 = vld [vmem:[%s317 + $0x88] sm:$0xf]
        %v403 = vld [vmem:[%s317 + $0x8c] sm:$0xf]
        %v404 = vld [vmem:[%s317 + $0x90] sm:$0xf]
        %v405 = vld [vmem:[%s317 + $0x94] sm:$0xf]
        %v406 = vld [vmem:[%s317 + $0x98] sm:$0xf]
        %v407 = vld [vmem:[%s317 + $0x9c] sm:$0xf]
        %v408 = vld [vmem:[%s317 + $0xa0] sm:$0xf]
        %v409 = vld [vmem:[%s317 + $0xa4] sm:$0xf]
        %v410 = vld [vmem:[%s317 + $0xa8] sm:$0xf]
        %v411 = vld [vmem:[%s317 + $0xac] sm:$0xf]
        %v412 = vld [vmem:[%s317 + $0xb0] sm:$0xf]
        %v413 = vld [vmem:[%s317 + $0xb4] sm:$0xf]
        %v414 = vld [vmem:[%s317 + $0xb8] sm:$0xf]
        %v415 = vld [vmem:[%s317 + $0xbc] sm:$0xf]
        %v416 = vld [vmem:[%s317 + $0xc0] sm:$0xf]
        %v417 = vld [vmem:[%s317 + $0xc4] sm:$0xf]
        %v418 = vld [vmem:[%s317 + $0xc8] sm:$0xf]
        %v419 = vld [vmem:[%s317 + $0xcc] sm:$0xf]
        %v420 = vld [vmem:[%s317 + $0xd0] sm:$0xf]
        %v421 = vld [vmem:[%s317 + $0xd4] sm:$0xf]
        %v422 = vld [vmem:[%s317 + $0xd8] sm:$0xf]
        %v423 = vld [vmem:[%s317 + $0xdc] sm:$0xf]
        %v424 = vld [vmem:[%s317 + $0xe0] sm:$0xf]
        %v425 = vld [vmem:[%s317 + $0xe4] sm:$0xf]
        %v426 = vld [vmem:[%s317 + $0xe8] sm:$0xf]
        %v427 = vld [vmem:[%s317 + $0xec] sm:$0xf]
        %v428 = vld [vmem:[%s317 + $0xf0] sm:$0xf]
        %v429 = vld [vmem:[%s317 + $0xf4] sm:$0xf]
        %v430 = vld [vmem:[%s317 + $0xf8] sm:$0xf]
        %v431 = vld [vmem:[%s317 + $0xfc] sm:$0xf]
        %433 = vst [vmem:[#allocation1] ss:$9 sm:$0xff] %v367
        %v434 = vld [vmem:[#allocation1] sm:$0xff]
        %v435 = vld [vmem:[#allocation1 + $0x9] sm:$0xff]
        %v436 = vld [vmem:[#allocation1 + $0x12] sm:$0xff]
        %v437 = vld [vmem:[#allocation1 + $0x1b] sm:$0xff]
        %v506 = vunpack.c.l.b16 %v368
        %v507 = vunpack.c.l.b16 %v369
        %v508 = vunpack.c.l.b16 %v370
        %v509 = vunpack.c.l.b16 %v371
        %v510 = vunpack.c.l.b16 %v372
        %v511 = vunpack.c.l.b16 %v373
        %v512 = vunpack.c.l.b16 %v374
        %v513 = vunpack.c.l.b16 %v375
        %v514 = vunpack.c.l.b16 %v376
        %v515 = vunpack.c.l.b16 %v377
        %v516 = vunpack.c.l.b16 %v378
        %v517 = vunpack.c.l.b16 %v379
        %v518 = vunpack.c.l.b16 %v380
        %v519 = vunpack.c.l.b16 %v381
        %v520 = vunpack.c.l.b16 %v382
        %v521 = vunpack.c.l.b16 %v383
        %v522 = vunpack.c.l.b16 %v384
        %v523 = vunpack.c.l.b16 %v385
        %v524 = vunpack.c.l.b16 %v386
        %v525 = vunpack.c.l.b16 %v387
        %v526 = vunpack.c.l.b16 %v388
        %v527 = vunpack.c.l.b16 %v389
        %v528 = vunpack.c.l.b16 %v390
        %v529 = vunpack.c.l.b16 %v391
        %v530 = vunpack.c.l.b16 %v392
        %v531 = vunpack.c.l.b16 %v393
        %v532 = vunpack.c.l.b16 %v394
        %v533 = vunpack.c.l.b16 %v395
        %v534 = vunpack.c.l.b16 %v396
        %v535 = vunpack.c.l.b16 %v397
        %v536 = vunpack.c.l.b16 %v398
        %v537 = vunpack.c.l.b16 %v399
        %v538 = vunpack.c.l.b16 %v400
        %v539 = vunpack.c.l.b16 %v401
        %v540 = vunpack.c.l.b16 %v402
        %v541 = vunpack.c.l.b16 %v403
        %v542 = vunpack.c.l.b16 %v404
        %v543 = vunpack.c.l.b16 %v405
        %v544 = vunpack.c.l.b16 %v406
        %v545 = vunpack.c.l.b16 %v407
        %v546 = vunpack.c.l.b16 %v408
        %v547 = vunpack.c.l.b16 %v409
        %v548 = vunpack.c.l.b16 %v410
        %v549 = vunpack.c.l.b16 %v411
        %v550 = vunpack.c.l.b16 %v412
        %v551 = vunpack.c.l.b16 %v413
        %v552 = vunpack.c.l.b16 %v414
        %v553 = vunpack.c.l.b16 %v415
        %v554 = vunpack.c.l.b16 %v416
        %v555 = vunpack.c.l.b16 %v417
        %v556 = vunpack.c.l.b16 %v418
        %v557 = vunpack.c.l.b16 %v419
        %v558 = vunpack.c.l.b16 %v420
        %v559 = vunpack.c.l.b16 %v421
        %v560 = vunpack.c.l.b16 %v422
        %v561 = vunpack.c.l.b16 %v423
        %v562 = vunpack.c.l.b16 %v424
        %v563 = vunpack.c.l.b16 %v425
        %v564 = vunpack.c.l.b16 %v426
        %v565 = vunpack.c.l.b16 %v427
        %v566 = vunpack.c.l.b16 %v428
        %v567 = vunpack.c.l.b16 %v429
        %v568 = vunpack.c.l.b16 %v430
        %v569 = vunpack.c.l.b16 %v431
        %v570 = vpack.c.b16 %v507, %v506
        %v571 = vpack.c.b16 %v509, %v508
        %v572 = vpack.c.b16 %v511, %v510
        %v573 = vpack.c.b16 %v513, %v512
        %v574 = vpack.c.b16 %v515, %v514
        %v575 = vpack.c.b16 %v517, %v516
        %v576 = vpack.c.b16 %v519, %v518
        %v577 = vpack.c.b16 %v521, %v520
        %v578 = vpack.c.b16 %v523, %v522
        %v579 = vpack.c.b16 %v525, %v524
        %v580 = vpack.c.b16 %v527, %v526
        %v581 = vpack.c.b16 %v529, %v528
        %v582 = vpack.c.b16 %v531, %v530
        %v583 = vpack.c.b16 %v533, %v532
        %v584 = vpack.c.b16 %v535, %v534
        %v585 = vpack.c.b16 %v537, %v536
        %v586 = vpack.c.b16 %v539, %v538
        %v587 = vpack.c.b16 %v541, %v540
        %v588 = vpack.c.b16 %v543, %v542
        %v589 = vpack.c.b16 %v545, %v544
        %v590 = vpack.c.b16 %v547, %v546
        %v591 = vpack.c.b16 %v549, %v548
        %v592 = vpack.c.b16 %v551, %v550
        %v593 = vpack.c.b16 %v553, %v552
        %v594 = vpack.c.b16 %v555, %v554
        %v595 = vpack.c.b16 %v557, %v556
        %v596 = vpack.c.b16 %v559, %v558
        %v597 = vpack.c.b16 %v561, %v560
        %v598 = vpack.c.b16 %v563, %v562
        %v599 = vpack.c.b16 %v565, %v564
        %v600 = vpack.c.b16 %v567, %v566
        %v601 = vpack.c.b16 %v569, %v568
        %634 = vmatpush.bf16.msra.mxu0 %v577
        %635 = vmatpush.bf16.msra.mxu0 %v576
        %636 = vmatpush.bf16.msra.mxu0 %v575
        %637 = vmatpush.bf16.msra.mxu0 %v574
        %638 = vmatpush.bf16.msra.mxu0 %v573
        %639 = vmatpush.bf16.msra.mxu0 %v572
        %640 = vmatpush.bf16.msra.mxu0 %v571
        %641 = vmatpush.bf16.msra.mxu0 %v570
        %642 = vmatmul.bf16.gmra.mxu0 %v434
        %v643 = vpop.f32.mrf.mxu0
        %v644 = vadd.f32 0.0, %v643
        %v645 = vpop.f32.mrf.mxu0
        %646 = vdwg.mxu0
        %647 = vmatpush.bf16.msra.mxu0 %v585
        %648 = vmatpush.bf16.msra.mxu0 %v584
        %649 = vmatpush.bf16.msra.mxu0 %v583
        %650 = vmatpush.bf16.msra.mxu0 %v582
        %651 = vmatpush.bf16.msra.mxu0 %v581
        %652 = vmatpush.bf16.msra.mxu0 %v580
        %653 = vmatpush.bf16.msra.mxu0 %v579
        %654 = vmatpush.bf16.msra.mxu0 %v578
        %655 = vmatmul.bf16.gmra.mxu0 %v435
        %v656 = vpop.f32.mrf.mxu0
        %v657 = vadd.f32 %v644, %v656
        %v658 = vpop.f32.mrf.mxu0
        %659 = vdwg.mxu0
        %660 = vmatpush.bf16.msra.mxu0 %v593
        %661 = vmatpush.bf16.msra.mxu0 %v592
        %662 = vmatpush.bf16.msra.mxu0 %v591
        %663 = vmatpush.bf16.msra.mxu0 %v590
        %664 = vmatpush.bf16.msra.mxu0 %v589
        %665 = vmatpush.bf16.msra.mxu0 %v588
        %666 = vmatpush.bf16.msra.mxu0 %v587
        %667 = vmatpush.bf16.msra.mxu0 %v586
        %668 = vmatmul.bf16.gmra.mxu0 %v436
        %v669 = vpop.f32.mrf.mxu0
        %v670 = vadd.f32 %v657, %v669
        %v671 = vpop.f32.mrf.mxu0
        %672 = vdwg.mxu0
        %673 = vmatpush.bf16.msra.mxu0 %v601
        %674 = vmatpush.bf16.msra.mxu0 %v600
        %675 = vmatpush.bf16.msra.mxu0 %v599
        %676 = vmatpush.bf16.msra.mxu0 %v598
        %677 = vmatpush.bf16.msra.mxu0 %v597
        %678 = vmatpush.bf16.msra.mxu0 %v596
        %679 = vmatpush.bf16.msra.mxu0 %v595
        %680 = vmatpush.bf16.msra.mxu0 %v594
        %681 = vmatmul.bf16.gmra.mxu0 %v437
        %v682 = vpop.f32.mrf.mxu0
        %v683 = vadd.f32 %v670, %v682
        %v684 = vpop.f32.mrf.mxu0
        %685 = vdwg.mxu0
        %v686 = vadd.f32 %v366, %v683
        %687 = vst [vmem:[#allocation2] sm:$0x3] %v686
        %p688 = scmp.eq.s32.totalorder %s26, 1
        // Predicated region
        $region69: #{tpu_custom_call.1} parent=47 // pred_check
          %p689 = pneg %p688
        $region70: #{tpu_custom_call.1} parent=47 // pred_check_branch
          %691 = sbr.rel (%p689) target = $region72
        $region71: #{tpu_custom_call.1} parent=47 // pred_region
          %v692 = vld [vmem:[#allocation2] sm:$0x3]
          %v693 = vld [vmem:[%s2] sm:$0x1]
          %v695 = vperm.slane %v693, 0
          %v697 = vadd.f32 %v692, %v695
          %v698 = vmax.f32 %v697, 0.0
          %v699 = vld [vmem:[#allocation8] sm:$0xf]
          %v700 = vld [vmem:[#allocation8 + $0x4] sm:$0xf]
          %v701 = vld [vmem:[#allocation8 + $0x8] sm:$0xf]
          %v702 = vld [vmem:[#allocation8 + $0xc] sm:$0xf]
          %v703 = vld [vmem:[#allocation8 + $0x10] sm:$0xf]
          %v704 = vld [vmem:[#allocation8 + $0x14] sm:$0xf]
          %v705 = vld [vmem:[#allocation8 + $0x18] sm:$0xf]
          %v706 = vld [vmem:[#allocation8 + $0x1c] sm:$0xf]
          %v707 = vld [vmem:[#allocation8 + $0x20] sm:$0xf]
          %v708 = vld [vmem:[#allocation8 + $0x24] sm:$0xf]
          %v709 = vld [vmem:[#allocation8 + $0x28] sm:$0xf]
          %v710 = vld [vmem:[#allocation8 + $0x2c] sm:$0xf]
          %v711 = vld [vmem:[#allocation8 + $0x30] sm:$0xf]
          %v712 = vld [vmem:[#allocation8 + $0x34] sm:$0xf]
          %v713 = vld [vmem:[#allocation8 + $0x38] sm:$0xf]
          %v714 = vld [vmem:[#allocation8 + $0x3c] sm:$0xf]
          %v715 = vld [vmem:[%s4] sm:$0x1]
          %v716 = vpack.c.bf16 %v698, %v698
          %v718 = vperm.slane %v715, 0
          %v736 = vunpack.c.l.b16 %v699
          %v737 = vunpack.c.l.b16 %v700
          %v738 = vunpack.c.l.b16 %v701
          %v739 = vunpack.c.l.b16 %v702
          %v740 = vunpack.c.l.b16 %v703
          %v741 = vunpack.c.l.b16 %v704
          %v742 = vunpack.c.l.b16 %v705
          %v743 = vunpack.c.l.b16 %v706
          %v744 = vunpack.c.l.b16 %v707
          %v745 = vunpack.c.l.b16 %v708
          %v746 = vunpack.c.l.b16 %v709
          %v747 = vunpack.c.l.b16 %v710
          %v748 = vunpack.c.l.b16 %v711
          %v749 = vunpack.c.l.b16 %v712
          %v750 = vunpack.c.l.b16 %v713
          %v751 = vunpack.c.l.b16 %v714
          %v752 = vpack.c.b16 %v737, %v736
          %v753 = vpack.c.b16 %v739, %v738
          %v754 = vpack.c.b16 %v741, %v740
          %v755 = vpack.c.b16 %v743, %v742
          %v756 = vpack.c.b16 %v745, %v744
          %v757 = vpack.c.b16 %v747, %v746
          %v758 = vpack.c.b16 %v749, %v748
          %v759 = vpack.c.b16 %v751, %v750
          %768 = vmatpush.bf16.msra.mxu0 %v759
          %769 = vmatpush.bf16.msra.mxu0 %v758
          %770 = vmatpush.bf16.msra.mxu0 %v757
          %771 = vmatpush.bf16.msra.mxu0 %v756
          %772 = vmatpush.bf16.msra.mxu0 %v755
          %773 = vmatpush.bf16.msra.mxu0 %v754
          %774 = vmatpush.bf16.msra.mxu0 %v753
          %775 = vmatpush.bf16.msra.mxu0 %v752
          %776 = vmatmul.bf16.gmra.mxu0 %v716
          %v777 = vpop.f32.mrf.mxu0
          %v778 = vadd.f32 %v718, %v777
          %v779 = vpop.f32.mrf.mxu0
          %780 = vdwg.mxu0
          %v781 = vmax.f32 %v778, 0.0
          %v782 = vld [vmem:[#allocation9] sm:$0xf]
          %v783 = vld [vmem:[#allocation9 + $0x4] sm:$0xf]
          %v784 = vld [vmem:[#allocation9 + $0x8] sm:$0xf]
          %v785 = vld [vmem:[#allocation9 + $0xc] sm:$0xf]
          %v786 = vld [vmem:[#allocation9 + $0x10] sm:$0xf]
          %v787 = vld [vmem:[#allocation9 + $0x14] sm:$0xf]
          %v788 = vld [vmem:[#allocation9 + $0x18] sm:$0xf]
          %v789 = vld [vmem:[#allocation9 + $0x1c] sm:$0xf]
          %v790 = vld [vmem:[#allocation9 + $0x20] sm:$0xf]
          %v791 = vld [vmem:[#allocation9 + $0x24] sm:$0xf]
          %v792 = vld [vmem:[#allocation9 + $0x28] sm:$0xf]
          %v793 = vld [vmem:[#allocation9 + $0x2c] sm:$0xf]
          %v794 = vld [vmem:[#allocation9 + $0x30] sm:$0xf]
          %v795 = vld [vmem:[#allocation9 + $0x34] sm:$0xf]
          %v796 = vld [vmem:[#allocation9 + $0x38] sm:$0xf]
          %v797 = vld [vmem:[#allocation9 + $0x3c] sm:$0xf]
          %v798 = vld [vmem:[%s6] sm:$0x1]
          %v799 = vpack.c.bf16 %v781, %v781
          %v801 = vperm.slane %v798, 0
          %v819 = vunpack.c.l.b16 %v782
          %v820 = vunpack.c.l.b16 %v783
          %v821 = vunpack.c.l.b16 %v784
          %v822 = vunpack.c.l.b16 %v785
          %v823 = vunpack.c.l.b16 %v786
          %v824 = vunpack.c.l.b16 %v787
          %v825 = vunpack.c.l.b16 %v788
          %v826 = vunpack.c.l.b16 %v789
          %v827 = vunpack.c.l.b16 %v790
          %v828 = vunpack.c.l.b16 %v791
          %v829 = vunpack.c.l.b16 %v792
          %v830 = vunpack.c.l.b16 %v793
          %v831 = vunpack.c.l.b16 %v794
          %v832 = vunpack.c.l.b16 %v795
          %v833 = vunpack.c.l.b16 %v796
          %v834 = vunpack.c.l.b16 %v797
          %v835 = vpack.c.b16 %v820, %v819
          %v836 = vpack.c.b16 %v822, %v821
          %v837 = vpack.c.b16 %v824, %v823
          %v838 = vpack.c.b16 %v826, %v825
          %v839 = vpack.c.b16 %v828, %v827
          %v840 = vpack.c.b16 %v830, %v829
          %v841 = vpack.c.b16 %v832, %v831
          %v842 = vpack.c.b16 %v834, %v833
          %851 = vmatpush.bf16.msra.mxu0 %v842
          %852 = vmatpush.bf16.msra.mxu0 %v841
          %853 = vmatpush.bf16.msra.mxu0 %v840
          %854 = vmatpush.bf16.msra.mxu0 %v839
          %855 = vmatpush.bf16.msra.mxu0 %v838
          %856 = vmatpush.bf16.msra.mxu0 %v837
          %857 = vmatpush.bf16.msra.mxu0 %v836
          %858 = vmatpush.bf16.msra.mxu0 %v835
          %859 = vmatmul.bf16.gmra.mxu0 %v799
          %v860 = vpop.f32.mrf.mxu0
          %v861 = vadd.f32 %v801, %v860
          %v862 = vpop.f32.mrf.mxu0
          %863 = vdwg.mxu0
          %vm864 = vcmask 1041408
          %v865 = vsel %vm864, %v861, -inf
          %866 = vmax.xlane.f32.xlu0 %v865
          %v867 = vpop.xlane.xlu0 %866
          %v868 = vsub.f32 %v861, %v867
          %v869 = vmul.f32 %v868, 1.442695
          %v870 = vpow.pop %v869
          %v871 = vsel %vm864, %v870, 0.0
          %872 = vadd.xlane.f32.xlu0 %v871
          %v873 = vpop.xlane.xlu0 %872
          %v874 = vlog2.pop %v873
          %v875 = vmul.f32 %v874, 0.6931472
          %v876 = vsub.f32 %v868, %v875
          %877 = vst [vmem:[#allocation11] sm:$0x3] %v876
        $region72: #{tpu_custom_call.1} parent=47 // pred_fallthru
          _
        // Predicated region
        $region73: #{tpu_custom_call.1} parent=47 // pred_check
          %p878 = pneg %p196
        $region74: #{tpu_custom_call.1} parent=47 // pred_check_branch
          %880 = sbr.rel (%p878) target = $region76
        $region75: #{tpu_custom_call.1} parent=47 // pred_region
          %882 = vsyncadd [#allocation5], 0
          %s884 = sshll.u32 [#allocation11], 4
          %s885 = int_to_ptr.vmem [resolvable:$true] %s884
          %s886 = sshll.u32 %s7, 4
          %s887 = int_to_ptr.hbm [resolvable:$true] %s886
          %889 = dma.vmem_to_hbm [thread:$0]  %s885, 32, %s887, [#allocation5]
        $region76: #{tpu_custom_call.1} parent=47 // pred_fallthru
          _
        // Predicated region
        $region77: #{tpu_custom_call.1} parent=47 // pred_check
          %p890 = pneg %p196
        $region78: #{tpu_custom_call.1} parent=47 // pred_check_branch
          %892 = sbr.rel (%p890) target = $region80
        $region79: #{tpu_custom_call.1} parent=47 // pred_region
          %894 = dma.done [#allocation5], 32
        $region80: #{tpu_custom_call.1} parent=47 // pred_fallthru
          _
      $region48: #{tpu_custom_call.1} parent=5 // pred_fallthru
        _
      %p895 = scmp.le.s32.totalorder 2, %s21
      // Predicated region
      $region81: #{tpu_custom_call.1} parent=5 // pred_check
        %p896 = pneg %p895
      $region82: #{tpu_custom_call.1} parent=5 // pred_check_branch
        %898 = sbr.rel (%p896) target = $region84
      $region83: #{tpu_custom_call.1} parent=5 // pred_region
        %s899 = ssub.s32 %s21, 2
      $region84: #{tpu_custom_call.1} parent=5 // pred_fallthru
        _
    $region6: #{tpu_custom_call.1} parent=1 // loop_footer
      %s25 = sadd.s32 1, %s21
    $region7: #{tpu_custom_call.1} parent=1 // loop_footer_branch
      %20 = sbr.rel target = $region3
    $region8: #{tpu_custom_call.1} parent=1 // loop_exit
      _
    %900 = vsyncpa [#allocation4], 1
    %s901 = scalar_lea.sflag [#allocation4], 1
    %902 = vsyncpa %s901, 1
    %903 = vsyncpa [#allocation7], 1
    %s904 = scalar_lea.sflag [#allocation7], 1
    %905 = vsyncpa %s904, 1
    %906 = vsyncpa [#allocation10], 1
    %907 = vsyncpa [#allocation5], 1
    %s908 = scalar_lea.sflag [#allocation5], 1
    %909 = vsyncpa %s908, 1

</llo_original>
